<compile_context>
chip_gen: v7x
topology: tpu7x:2x2x1
jax: 0.10.0
libtpu: 0.0.40
codegen_flags: <defaults>
</compile_context>

<pallas_src>
from typing import NamedTuple

import jax
import jax.numpy as jnp
from jax.experimental import pallas as pl
from jax.experimental.pallas import tpu as pltpu


def _round_up(x, m):
    return -(-x // m) * m


class PreparedParams(NamedTuple):
    w1g: jax.Array   # (gnn_dim,  fpad)
    w1b: jax.Array   # (bert_dim, fpad)
    b1:  jax.Array   # (1, fpad) f32
    w2:  jax.Array   # (fpad, fpad)
    b2:  jax.Array   # (1, fpad) f32
    wpg: jax.Array   # (gnn_dim,  fpad)
    wpb: jax.Array   # (bert_dim, fpad)
    bp:  jax.Array   # (1, fpad) f32
    fused_dim: int


def prepare_params(params, gnn_dim, *, weight_dtype=None):
    """One-time weight prep (hoisted out of the per-call path):
    split the concat dim row-wise, zero-pad the fused dim to a multiple of
    128 lanes, and optionally cast the matmul weights to bf16."""
    w1, b1, w2, b2, wp, bp = params          # weights stored (in, out)
    fused_dim = int(w1.shape[1])
    fpad = _round_up(fused_dim, 128)

    def cast(a):
        return a if weight_dtype is None else a.astype(weight_dtype)

    def pad_cols(a):
        pad = fpad - a.shape[-1]
        return a if pad == 0 else jnp.pad(a, ((0, 0), (0, pad)))

    w1g = cast(pad_cols(w1[:gnn_dim]))
    w1b = cast(pad_cols(w1[gnn_dim:]))
    wpg = cast(pad_cols(wp[:gnn_dim]))
    wpb = cast(pad_cols(wp[gnn_dim:]))
    w2p = cast(jnp.pad(w2, ((0, fpad - fused_dim), (0, fpad - fused_dim))))
    b1p = pad_cols(b1.reshape(1, -1)).astype(jnp.float32)
    b2p = pad_cols(b2.reshape(1, -1)).astype(jnp.float32)
    bpp = pad_cols(bp.reshape(1, -1)).astype(jnp.float32)
    return PreparedParams(w1g, w1b, b1p, w2p, b2p, wpg, wpb, bpp, fused_dim)


def _gated_fusion_kernel(gnn_ref, bert_ref,
                         w1g_ref, w1b_ref, b1_ref,
                         w2_ref, b2_ref,
                         wpg_ref, wpb_ref, bp_ref,
                         o_ref):
    # Activations run through the MXU in the weight dtype (bf16 if requested),
    # accumulation and the epilogue stay f32.
    mxu_dt = w1g_ref.dtype
    g_in = gnn_ref[...].astype(mxu_dt)     # (tm, gnn_dim)
    b_in = bert_ref[...].astype(mxu_dt)    # (tm, bert_dim)

    # hidden = relu(concat(g, b) @ W1 + b1), concat realized as split matmuls
    # so the concatenated activation never round-trips through HBM.
    h = jnp.dot(g_in, w1g_ref[...], preferred_element_type=jnp.float32)
    h = h + jnp.dot(b_in, w1b_ref[...], preferred_element_type=jnp.float32)
    h = jnp.maximum(h + b1_ref[...], 0.0)

    # gate = sigmoid(hidden @ W2 + b2)
    gate = jnp.dot(h.astype(w2_ref.dtype), w2_ref[...],
                   preferred_element_type=jnp.float32)
    gate = jax.nn.sigmoid(gate + b2_ref[...])

    # projected = concat(g, b) @ Wp + bp
    proj = jnp.dot(g_in, wpg_ref[...], preferred_element_type=jnp.float32)
    proj = proj + jnp.dot(b_in, wpb_ref[...], preferred_element_type=jnp.float32)
    proj = proj + bp_ref[...]

    res = gate * proj                      # (tm, fpad) f32
    # Store only the real fused columns (masked vst on the last lane tile);
    # cheaper than writing a padded buffer and slicing it afterwards.
    o_ref[...] = res[:, :o_ref.shape[-1]].astype(o_ref.dtype)


def _vmem_capacity_bytes():
    try:
        return int(pltpu.get_tpu_info().vmem_capacity_bytes)
    except Exception:
        return 64 * 1024 * 1024            # conservative: v7x per-TensorCore


def _xla_gated_fusion(gnn_emb, bert_emb, p, out_dtype):
    # Plain-XLA fallback when the resident-weight layout can't fit VMEM.
    # TODO(synk): tile a second grid axis over fused output columns instead.
    h = (jnp.dot(gnn_emb, p.w1g, preferred_element_type=jnp.float32)
         + jnp.dot(bert_emb, p.w1b, preferred_element_type=jnp.float32) + p.b1)
    h = jnp.maximum(h, 0.0)
    gate = jax.nn.sigmoid(
        jnp.dot(h.astype(p.w2.dtype), p.w2,
                preferred_element_type=jnp.float32) + p.b2)
    proj = (jnp.dot(gnn_emb, p.wpg, preferred_element_type=jnp.float32)
            + jnp.dot(bert_emb, p.wpb, preferred_element_type=jnp.float32)
            + p.bp)
    return ((gate * proj)[:, :p.fused_dim]).astype(out_dtype)


def gated_fusion(gnn_emb, bert_emb, prepared: PreparedParams, *, tm=256):
    """gnn_emb: (N, gnn_dim), bert_emb: (N, bert_dim) -> (N, fused_dim)."""
    p = prepared
    n, gnn_dim = gnn_emb.shape
    n2, bert_dim = bert_emb.shape
    assert n == n2
    assert p.w1g.shape[0] == gnn_dim and p.w1b.shape[0] == bert_dim
    fused_dim = p.fused_dim
    fpad = p.w1g.shape[1]

    out_dtype = jnp.result_type(gnn_emb.dtype, bert_emb.dtype, p.w1g.dtype)

    # Row tile: big enough to fill the 256-wide MXU on v6e/v7x, but always
    # >= 2 grid steps (when the batch allows) so both v7x TensorCores work.
    tm = int(min(tm, n))
    if tm < n:
        tm = min(_round_up(tm, 8), n)
    if n > 8 and pl.cdiv(n, tm) < 2:
        tm = max(8, _round_up(pl.cdiv(n, 2), 8))
    grid = (pl.cdiv(n, tm),)

    # VMEM budget: single-buffered resident weights + double-buffered
    # activation/output tiles + f32 intermediates; cap at ~85% of the chip's
    # physical VMEM (generation-aware, never the full physical ceiling).
    def nbytes(a):
        return a.size * a.dtype.itemsize

    weight_bytes = sum(nbytes(a) for a in
                       (p.w1g, p.w1b, p.b1, p.w2, p.b2, p.wpg, p.wpb, p.bp))
    act_bytes = tm * (gnn_dim * gnn_emb.dtype.itemsize
                      + bert_dim * bert_emb.dtype.itemsize
                      + fused_dim * jnp.dtype(out_dtype).itemsize)
    interm_bytes = 4 * tm * fpad * 4
    est = weight_bytes + 2 * act_bytes + interm_bytes
    vmem_ceiling = int(_vmem_capacity_bytes() * 0.85)
    if est > vmem_ceiling:
        return _xla_gated_fusion(gnn_emb, bert_emb, p, out_dtype)
    vmem_limit = int(min(vmem_ceiling, max(32 * 1024 * 1024, int(est * 1.3))))

    # Constant-index weight blocks: single pipeline buffer (the block never
    # changes, so a second buffer would only double the VMEM reservation).
    def resident(r, c):
        return pl.BlockSpec((r, c), lambda i: (0, 0),
                            pipeline_mode=pl.Buffered(1))

    return pl.pallas_call(
        _gated_fusion_kernel,
        out_shape=jax.ShapeDtypeStruct((n, fused_dim), out_dtype),
        grid_spec=pltpu.PrefetchScalarGridSpec(
            num_scalar_prefetch=0,
            grid=grid,
            in_specs=[
                pl.BlockSpec((tm, gnn_dim), lambda i: (i, 0)),    # gnn rows
                pl.BlockSpec((tm, bert_dim), lambda i: (i, 0)),   # bert rows
                resident(gnn_dim, fpad),     # W1 (gnn rows)
                resident(bert_dim, fpad),    # W1 (bert rows)
                resident(1, fpad),           # b1
                resident(fpad, fpad),        # W2
                resident(1, fpad),           # b2
                resident(gnn_dim, fpad),     # Wp (gnn rows)
                resident(bert_dim, fpad),    # Wp (bert rows)
                resident(1, fpad),           # bp
            ],
            out_specs=pl.BlockSpec((tm, fused_dim), lambda i: (i, 0)),
        ),
        compiler_params=pltpu.CompilerParams(
            dimension_semantics=("parallel",),
            vmem_limit_bytes=vmem_limit),
    )(gnn_emb, bert_emb,
      p.w1g, p.w1b, p.b1, p.w2, p.b2, p.wpg, p.wpb, p.bp)


def init_params(key, gnn_dim, bert_dim, fused_dim, dtype=jnp.float32):
    d_in = gnn_dim + bert_dim
    ks = jax.random.split(key, 6)
    # Stored already transposed to (in, out); biases as (1, out).
    w1 = jax.random.normal(ks[0], (d_in, fused_dim), dtype) * 0.1
    b1 = jax.random.normal(ks[1], (1, fused_dim), dtype) * 0.1
    w2 = jax.random.normal(ks[2], (fused_dim, fused_dim), dtype) * 0.1
    b2 = jax.random.normal(ks[3], (1, fused_dim), dtype) * 0.1
    wp = jax.random.normal(ks[4], (d_in, fused_dim), dtype) * 0.1
    bp = jax.random.normal(ks[5], (1, fused_dim), dtype) * 0.1
    return (w1, b1, w2, b2, wp, bp)


def _reference(gnn_emb, bert_emb, params):
    w1, b1, w2, b2, wp, bp = params
    c = jnp.concatenate([gnn_emb, bert_emb], axis=-1)
    g = jax.nn.sigmoid(jnp.maximum(c @ w1 + b1, 0.0) @ w2 + b2)
    p = c @ wp + bp
    return g * p


if __name__ == "__main__":
    key = jax.random.PRNGKey(0)
    k_g, k_b, k_p, k_g2, k_b2, k_p2 = jax.random.split(key, 6)

    # Test 1: small shapes consistent with the module.
    batch, gnn_dim, bert_dim, fused_dim = 8, 16, 16, 32
    gnn_emb = jax.random.normal(k_g, (batch, gnn_dim), jnp.float32)
    bert_emb = jax.random.normal(k_b, (batch, bert_dim), jnp.float32)
    params = init_params(k_p, gnn_dim, bert_dim, fused_dim)
    prepped = prepare_params(params, gnn_dim)          # one-time weight prep

    out = gated_fusion(gnn_emb, bert_emb, prepped)
    jax.block_until_ready(out)
    ref = _reference(gnn_emb, bert_emb, params)
    assert out.shape == (batch, fused_dim)
    assert jnp.allclose(out, ref, atol=1e-5, rtol=1e-5)

    # Test 2: multi-step row grid (>= 2 steps for v7x), masked final row tile,
    # and a fused_dim that is not a multiple of 128 (masked output store).
    n2, gd2, bd2, fd2 = 200, 48, 80, 96
    gnn2 = jax.random.normal(k_g2, (n2, gd2), jnp.float32)
    bert2 = jax.random.normal(k_b2, (n2, bd2), jnp.float32)
    params2 = init_params(k_p2, gd2, bd2, fd2)
    prepped2 = prepare_params(params2, gd2)
    out2 = gated_fusion(gnn2, bert2, prepped2)
    jax.block_until_ready(out2)
    ref2 = _reference(gnn2, bert2, params2)
    assert out2.shape == (n2, fd2)
    assert jnp.allclose(out2, ref2, atol=1e-3, rtol=1e-3)

    # Test 3: bf16 MXU path (weights + in-kernel activation cast, f32 accum).
    prepped_bf16 = prepare_params(params, gnn_dim, weight_dtype=jnp.bfloat16)
    out3 = gated_fusion(gnn_emb, bert_emb, prepped_bf16)
    jax.block_until_ready(out3)
    assert out3.shape == (batch, fused_dim)
    assert jnp.allclose(out3.astype(jnp.float32), ref, atol=5e-2, rtol=5e-2)

    print("KERNEL_OK")
</pallas_src>

<mosaic_0001>
module attributes {stable_mosaic.version = 11 : i64} {
  func.func @_gated_fusion_kernel(%arg0: i32, %arg1: memref<8x16xf32, #tpu.memory_space<vmem>>, %arg2: memref<8x16xf32, #tpu.memory_space<vmem>>, %arg3: memref<16x128xf32, #tpu.memory_space<vmem>>, %arg4: memref<16x128xf32, #tpu.memory_space<vmem>>, %arg5: memref<1x128xf32, #tpu.memory_space<vmem>>, %arg6: memref<128x128xf32, #tpu.memory_space<vmem>>, %arg7: memref<1x128xf32, #tpu.memory_space<vmem>>, %arg8: memref<16x128xf32, #tpu.memory_space<vmem>>, %arg9: memref<16x128xf32, #tpu.memory_space<vmem>>, %arg10: memref<1x128xf32, #tpu.memory_space<vmem>>, %arg11: memref<8x32xf32, #tpu.memory_space<vmem>>) attributes {dimension_semantics = [#tpu.dimension_semantics<parallel>], iteration_bounds = array<i64: 1>, scalar_prefetch = 0 : i64, scratch_operands = 0 : i64, tpu.core_type = #tpu.core_type<tc>, window_params = [{transform_indices = @transform_0, window_bounds = array<i64: 8, 16>}, {transform_indices = @transform_1, window_bounds = array<i64: 8, 16>}, {pipeline_mode = #tpu.pipeline_mode<synchronous>, transform_indices = @transform_2, window_bounds = array<i64: 16, 128>}, {pipeline_mode = #tpu.pipeline_mode<synchronous>, transform_indices = @transform_3, window_bounds = array<i64: 16, 128>}, {pipeline_mode = #tpu.pipeline_mode<synchronous>, transform_indices = @transform_4, window_bounds = array<i64: 1, 128>}, {pipeline_mode = #tpu.pipeline_mode<synchronous>, transform_indices = @transform_5, window_bounds = array<i64: 128, 128>}, {pipeline_mode = #tpu.pipeline_mode<synchronous>, transform_indices = @transform_6, window_bounds = array<i64: 1, 128>}, {pipeline_mode = #tpu.pipeline_mode<synchronous>, transform_indices = @transform_7, window_bounds = array<i64: 16, 128>}, {pipeline_mode = #tpu.pipeline_mode<synchronous>, transform_indices = @transform_8, window_bounds = array<i64: 16, 128>}, {pipeline_mode = #tpu.pipeline_mode<synchronous>, transform_indices = @transform_9, window_bounds = array<i64: 1, 128>}, {transform_indices = @transform_10, window_bounds = array<i64: 8, 32>}]} {
    %c0 = arith.constant 0 : index
    %c0_0 = arith.constant 0 : index
    %0 = vector.load %arg1[%c0, %c0_0] : memref<8x16xf32, #tpu.memory_space<vmem>>, vector<8x16xf32>
    %c0_1 = arith.constant 0 : index
    %c0_2 = arith.constant 0 : index
    %1 = vector.load %arg2[%c0_1, %c0_2] : memref<8x16xf32, #tpu.memory_space<vmem>>, vector<8x16xf32>
    %c0_3 = arith.constant 0 : index
    %c0_4 = arith.constant 0 : index
    %2 = vector.load %arg3[%c0_3, %c0_4] : memref<16x128xf32, #tpu.memory_space<vmem>>, vector<16x128xf32>
    %cst = arith.constant dense<0.000000e+00> : vector<8x128xf32>
    %3 = tpu.matmul %0, %2, %cst {dimension_numbers = #tpu.dot_dimension_numbers<[1], [0], [0], [1], [0, 0, 1, 1], [], []>} : vector<8x16xf32>, vector<16x128xf32>, vector<8x128xf32> -> vector<8x128xf32>
    %c0_5 = arith.constant 0 : index
    %c0_6 = arith.constant 0 : index
    %4 = vector.load %arg4[%c0_5, %c0_6] : memref<16x128xf32, #tpu.memory_space<vmem>>, vector<16x128xf32>
    %cst_7 = arith.constant dense<0.000000e+00> : vector<8x128xf32>
    %5 = tpu.matmul %1, %4, %cst_7 {dimension_numbers = #tpu.dot_dimension_numbers<[1], [0], [0], [1], [0, 0, 1, 1], [], []>} : vector<8x16xf32>, vector<16x128xf32>, vector<8x128xf32> -> vector<8x128xf32>
    %6 = arith.addf %3, %5 : vector<8x128xf32>
    %c0_8 = arith.constant 0 : index
    %c0_9 = arith.constant 0 : index
    %7 = vector.load %arg5[%c0_8, %c0_9] : memref<1x128xf32, #tpu.memory_space<vmem>>, vector<1x128xf32>
    %8 = vector.broadcast %7 : vector<1x128xf32> to vector<8x128xf32>
    %9 = arith.addf %6, %8 : vector<8x128xf32>
    %cst_10 = arith.constant 0.000000e+00 : f32
    %10 = vector.broadcast %cst_10 : f32 to vector<8x128xf32>
    %11 = arith.maximumf %9, %10 : vector<8x128xf32>
    %c0_11 = arith.constant 0 : index
    %c0_12 = arith.constant 0 : index
    %12 = vector.load %arg6[%c0_11, %c0_12] : memref<128x128xf32, #tpu.memory_space<vmem>>, vector<128x128xf32>
    %cst_13 = arith.constant dense<0.000000e+00> : vector<8x128xf32>
    %13 = tpu.matmul %11, %12, %cst_13 {dimension_numbers = #tpu.dot_dimension_numbers<[1], [0], [0], [1], [0, 0, 1, 1], [], []>} : vector<8x128xf32>, vector<128x128xf32>, vector<8x128xf32> -> vector<8x128xf32>
    %c0_14 = arith.constant 0 : index
    %c0_15 = arith.constant 0 : index
    %14 = vector.load %arg7[%c0_14, %c0_15] : memref<1x128xf32, #tpu.memory_space<vmem>>, vector<1x128xf32>
    %15 = vector.broadcast %14 : vector<1x128xf32> to vector<8x128xf32>
    %16 = arith.addf %13, %15 : vector<8x128xf32>
    %17 = arith.negf %16 : vector<8x128xf32>
    %18 = math.exp %17 : vector<8x128xf32>
    %cst_16 = arith.constant 1.000000e+00 : f32
    %19 = vector.broadcast %cst_16 : f32 to vector<8x128xf32>
    %20 = arith.addf %19, %18 : vector<8x128xf32>
    %21 = arith.divf %19, %20 : vector<8x128xf32>
    %c0_17 = arith.constant 0 : index
    %c0_18 = arith.constant 0 : index
    %22 = vector.load %arg8[%c0_17, %c0_18] : memref<16x128xf32, #tpu.memory_space<vmem>>, vector<16x128xf32>
    %cst_19 = arith.constant dense<0.000000e+00> : vector<8x128xf32>
    %23 = tpu.matmul %0, %22, %cst_19 {dimension_numbers = #tpu.dot_dimension_numbers<[1], [0], [0], [1], [0, 0, 1, 1], [], []>} : vector<8x16xf32>, vector<16x128xf32>, vector<8x128xf32> -> vector<8x128xf32>
    %c0_20 = arith.constant 0 : index
    %c0_21 = arith.constant 0 : index
    %24 = vector.load %arg9[%c0_20, %c0_21] : memref<16x128xf32, #tpu.memory_space<vmem>>, vector<16x128xf32>
    %cst_22 = arith.constant dense<0.000000e+00> : vector<8x128xf32>
    %25 = tpu.matmul %1, %24, %cst_22 {dimension_numbers = #tpu.dot_dimension_numbers<[1], [0], [0], [1], [0, 0, 1, 1], [], []>} : vector<8x16xf32>, vector<16x128xf32>, vector<8x128xf32> -> vector<8x128xf32>
    %26 = arith.addf %23, %25 : vector<8x128xf32>
    %c0_23 = arith.constant 0 : index
    %c0_24 = arith.constant 0 : index
    %27 = vector.load %arg10[%c0_23, %c0_24] : memref<1x128xf32, #tpu.memory_space<vmem>>, vector<1x128xf32>
    %28 = vector.broadcast %27 : vector<1x128xf32> to vector<8x128xf32>
    %29 = arith.addf %26, %28 : vector<8x128xf32>
    %30 = arith.mulf %21, %29 : vector<8x128xf32>
    %31 = vector.extract_strided_slice %30 {offsets = [0, 0], sizes = [8, 32], strides = [1, 1]} : vector<8x128xf32> to vector<8x32xf32>
    %c0_25 = arith.constant 0 : index
    %c0_26 = arith.constant 0 : index
    %32 = vector.load %arg11[%c0_25, %c0_26] : memref<8x32xf32, #tpu.memory_space<vmem>>, vector<8x32xf32>
    tpu.vector_store %arg11[%c0_25, %c0_26], %31 {strides = array<i32>} : memref<8x32xf32, #tpu.memory_space<vmem>>, vector<8x32xf32>,
    return
  }
  func.func @transform_0(%arg0: i32) -> (i32, i32) {
    %c0_i32 = arith.constant 0 : i32
    %c0_i32_0 = arith.constant 0 : i32
    return %arg0, %c0_i32 : i32, i32
  }
  func.func @transform_1(%arg0: i32) -> (i32, i32) {
    %c0_i32 = arith.constant 0 : i32
    %c0_i32_0 = arith.constant 0 : i32
    return %arg0, %c0_i32 : i32, i32
  }
  func.func @transform_2(%arg0: i32) -> (i32, i32) {
    %c0_i32 = arith.constant 0 : i32
    %c0_i32_0 = arith.constant 0 : i32
    %c0_i32_1 = arith.constant 0 : i32
    return %c0_i32, %c0_i32_0 : i32, i32
  }
  func.func @transform_3(%arg0: i32) -> (i32, i32) {
    %c0_i32 = arith.constant 0 : i32
    %c0_i32_0 = arith.constant 0 : i32
    %c0_i32_1 = arith.constant 0 : i32
    return %c0_i32, %c0_i32_0 : i32, i32
  }
  func.func @transform_4(%arg0: i32) -> (i32, i32) {
    %c0_i32 = arith.constant 0 : i32
    %c0_i32_0 = arith.constant 0 : i32
    %c0_i32_1 = arith.constant 0 : i32
    return %c0_i32, %c0_i32_0 : i32, i32
  }
  func.func @transform_5(%arg0: i32) -> (i32, i32) {
    %c0_i32 = arith.constant 0 : i32
    %c0_i32_0 = arith.constant 0 : i32
    %c0_i32_1 = arith.constant 0 : i32
    return %c0_i32, %c0_i32_0 : i32, i32
  }
  func.func @transform_6(%arg0: i32) -> (i32, i32) {
    %c0_i32 = arith.constant 0 : i32
    %c0_i32_0 = arith.constant 0 : i32
    %c0_i32_1 = arith.constant 0 : i32
    return %c0_i32, %c0_i32_0 : i32, i32
  }
  func.func @transform_7(%arg0: i32) -> (i32, i32) {
    %c0_i32 = arith.constant 0 : i32
    %c0_i32_0 = arith.constant 0 : i32
    %c0_i32_1 = arith.constant 0 : i32
    return %c0_i32, %c0_i32_0 : i32, i32
  }
  func.func @transform_8(%arg0: i32) -> (i32, i32) {
    %c0_i32 = arith.constant 0 : i32
    %c0_i32_0 = arith.constant 0 : i32
    %c0_i32_1 = arith.constant 0 : i32
    return %c0_i32, %c0_i32_0 : i32, i32
  }
  func.func @transform_9(%arg0: i32) -> (i32, i32) {
    %c0_i32 = arith.constant 0 : i32
    %c0_i32_0 = arith.constant 0 : i32
    %c0_i32_1 = arith.constant 0 : i32
    return %c0_i32, %c0_i32_0 : i32, i32
  }
  func.func @transform_10(%arg0: i32) -> (i32, i32) {
    %c0_i32 = arith.constant 0 : i32
    %c0_i32_0 = arith.constant 0 : i32
    return %arg0, %c0_i32 : i32, i32
  }
}

</mosaic_0001>

<llo_original>
// kernel: tpu_custom_call.1
$region0: #{tpu_custom_call.1}
  #allocation0 [shape = 'u32[]', space=smem, size = 0x4, offset = 0x4, fixed_abs, tag = 'smem constant byte address 0x4 - core index']
  #allocation1 [shape = 'u32[144,128]{1,0:T(1,128)}', space=vmem, size = 0x12000, scoped, tag = 'internal scratch']
  %s0 = inlined_call_operand.hbm [shape: f32[8,16], index: 0, kind: input, shape index: {}]
  %s1 = inlined_call_operand.hbm [shape: f32[8,16], index: 1, kind: input, shape index: {}]
  %s2 = inlined_call_operand.hbm [shape: f32[16,128], index: 2, kind: input, shape index: {}]
  %s3 = inlined_call_operand.hbm [shape: f32[16,128], index: 3, kind: input, shape index: {}]
  %s4 = inlined_call_operand.vmem [shape: f32[1,128], index: 4, kind: input, shape index: {}]
  %s5 = inlined_call_operand.hbm [shape: f32[128,128], index: 5, kind: input, shape index: {}]
  %s6 = inlined_call_operand.vmem [shape: f32[1,128], index: 6, kind: input, shape index: {}]
  %s7 = inlined_call_operand.vmem [shape: f32[16,128], index: 7, kind: input, shape index: {}]
  %s8 = inlined_call_operand.hbm [shape: f32[16,128], index: 8, kind: input, shape index: {}]
  %s9 = inlined_call_operand.vmem [shape: f32[1,128], index: 9, kind: input, shape index: {}]
  %s10 = inlined_call_operand.hbm [shape: f32[8,32], index: 10, kind: output, shape index: {}]
  %s11 = sld [smem:[#allocation0]]
  $region74: #{tpu_custom_call.1} parent=0
    _
  %s13 = ssub.s32 1, %s11
  %s14 = scalar_select 0, %s13, %s11
  $region1: #{tpu_custom_call.1} parent=0
    #allocation2 [shape = 'u8[4096]{0}', space=vmem, size = 0x1000, scoped, tag = 'input window, operand 0, single buffered']
    #allocation3 [shape = 's32[1]{0}', space=sflag, size = 0x4, scoped, tag = 'scoped memory for tpu_custom_call.1']
    #allocation4 [shape = 's32[1]{0}', space=sflag, size = 0x4, scoped, tag = 'scoped memory for tpu_custom_call.1']
    #allocation5 [shape = 'u8[4096]{0}', space=vmem, size = 0x1000, scoped, tag = 'input window, operand 1, single buffered']
    #allocation6 [shape = 's32[1]{0}', space=sflag, size = 0x4, scoped, tag = 'scoped memory for tpu_custom_call.1']
    #allocation7 [shape = 'u8[8192]{0}', space=vmem, size = 0x2000, scoped, tag = 'input window, operand 2, single buffered']
    #allocation8 [shape = 'u8[8192]{0}', space=vmem, size = 0x2000, scoped, tag = 'input window, operand 3, single buffered']
    #allocation9 [shape = 's32[1]{0}', space=sflag, size = 0x4, scoped, tag = 'scoped memory for tpu_custom_call.1']
    #allocation10 [shape = 'u8[65536]{0}', space=vmem, size = 0x10000, scoped, tag = 'input window, operand 5, single buffered']
    #allocation11 [shape = 'u8[8192]{0}', space=vmem, size = 0x2000, scoped, tag = 'input window, operand 8, single buffered']
    #allocation12 [shape = 's32[1]{0}', space=sflag, size = 0x4, scoped, tag = 'scoped memory for tpu_custom_call.1']
    #allocation13 [shape = 'u8[4096]{0}', space=vmem, size = 0x1000, scoped, tag = 'output window, operand 0, single buffered']
    %15 = vsyncpa [#allocation3], 0
    %16 = vsyncpa [#allocation6], 0
    %17 = vsyncpa [#allocation9], 0
    %18 = vsyncpa [#allocation12], 0
    %19 = vsyncpa [#allocation4], 0
    // Predicated region
    $region2: #{tpu_custom_call.1} parent=1 // pred_check
      _
    $region3: #{tpu_custom_call.1} parent=1 // pred_check_branch
      %21 = sbr.rel (0) target = $region5
    $region4: #{tpu_custom_call.1} parent=1 // pred_region
      %s23 = ssub.s32 128, 128
      %24 = vsyncadd [#allocation3], %s23
      %s26 = sshll.u32 [#allocation2], 4
      %s27 = int_to_ptr.vmem [resolvable:$true] %s26
      %29 = dma.hbm_to_vmem [thread:$0]  %s0, 128, %s27, [#allocation3]
    $region5: #{tpu_custom_call.1} parent=1 // pred_fallthru
      _
    // Predicated region
    $region6: #{tpu_custom_call.1} parent=1 // pred_check
      _
    $region7: #{tpu_custom_call.1} parent=1 // pred_check_branch
      %31 = sbr.rel (0) target = $region9
    $region8: #{tpu_custom_call.1} parent=1 // pred_region
      %s33 = ssub.s32 128, 128
      %34 = vsyncadd [#allocation6], %s33
      %s36 = sshll.u32 [#allocation5], 4
      %s37 = int_to_ptr.vmem [resolvable:$true] %s36
      %39 = dma.hbm_to_vmem [thread:$0]  %s1, 128, %s37, [#allocation6]
    $region9: #{tpu_custom_call.1} parent=1 // pred_fallthru
      _
    // Predicated region
    $region10: #{tpu_custom_call.1} parent=1 // pred_check
      _
    $region11: #{tpu_custom_call.1} parent=1 // pred_check_branch
      %41 = sbr.rel (0) target = $region13
    $region12: #{tpu_custom_call.1} parent=1 // pred_region
      %s43 = ssub.s32 256, 256
      %44 = vsyncadd [#allocation6], %s43
      %s45 = sshll.u32 [#allocation7], 4
      %s46 = int_to_ptr.vmem [resolvable:$true] %s45
      %51 = dma.hbm_to_vmem [thread:$0]  %s2, 256, %s46, [#allocation6], 128, 128, 8
    $region13: #{tpu_custom_call.1} parent=1 // pred_fallthru
      _
    // Predicated region
    $region14: #{tpu_custom_call.1} parent=1 // pred_check
      _
    $region15: #{tpu_custom_call.1} parent=1 // pred_check_branch
      %53 = sbr.rel (0) target = $region17
    $region16: #{tpu_custom_call.1} parent=1 // pred_region
      %s55 = ssub.s32 256, 256
      %56 = vsyncadd [#allocation9], %s55
      %s57 = sshll.u32 [#allocation8], 4
      %s58 = int_to_ptr.vmem [resolvable:$true] %s57
      %63 = dma.hbm_to_vmem [thread:$0]  %s3, 256, %s58, [#allocation9], 128, 128, 8
    $region17: #{tpu_custom_call.1} parent=1 // pred_fallthru
      _
    // Predicated region
    $region18: #{tpu_custom_call.1} parent=1 // pred_check
      _
    $region19: #{tpu_custom_call.1} parent=1 // pred_check_branch
      %65 = sbr.rel (0) target = $region21
    $region20: #{tpu_custom_call.1} parent=1 // pred_region
      _
    $region21: #{tpu_custom_call.1} parent=1 // pred_fallthru
      _
    // Predicated region
    $region22: #{tpu_custom_call.1} parent=1 // pred_check
      _
    $region23: #{tpu_custom_call.1} parent=1 // pred_check_branch
      %67 = sbr.rel (0) target = $region25
    $region24: #{tpu_custom_call.1} parent=1 // pred_region
      %s69 = ssub.s32 2048, 2048
      %70 = vsyncadd [#allocation9], %s69
      %s71 = sshll.u32 [#allocation10], 4
      %s72 = int_to_ptr.vmem [resolvable:$true] %s71
      %77 = dma.hbm_to_vmem [thread:$0]  %s5, 2048, %s72, [#allocation9], 128, 128, 8
    $region25: #{tpu_custom_call.1} parent=1 // pred_fallthru
      _
    // Predicated region
    $region26: #{tpu_custom_call.1} parent=1 // pred_check
      _
    $region27: #{tpu_custom_call.1} parent=1 // pred_check_branch
      %79 = sbr.rel (0) target = $region29
    $region28: #{tpu_custom_call.1} parent=1 // pred_region
      _
    $region29: #{tpu_custom_call.1} parent=1 // pred_fallthru
      _
    // Predicated region
    $region30: #{tpu_custom_call.1} parent=1 // pred_check
      _
    $region31: #{tpu_custom_call.1} parent=1 // pred_check_branch
      %81 = sbr.rel (0) target = $region33
    $region32: #{tpu_custom_call.1} parent=1 // pred_region
      _
    $region33: #{tpu_custom_call.1} parent=1 // pred_fallthru
      _
    // Predicated region
    $region34: #{tpu_custom_call.1} parent=1 // pred_check
      _
    $region35: #{tpu_custom_call.1} parent=1 // pred_check_branch
      %83 = sbr.rel (0) target = $region37
    $region36: #{tpu_custom_call.1} parent=1 // pred_region
      %s85 = ssub.s32 256, 256
      %86 = vsyncadd [#allocation12], %s85
      %s87 = sshll.u32 [#allocation11], 4
      %s88 = int_to_ptr.vmem [resolvable:$true] %s87
      %93 = dma.hbm_to_vmem [thread:$0]  %s8, 256, %s88, [#allocation12], 128, 128, 8
    $region37: #{tpu_custom_call.1} parent=1 // pred_fallthru
      _
    // Predicated region
    $region38: #{tpu_custom_call.1} parent=1 // pred_check
      _
    $region39: #{tpu_custom_call.1} parent=1 // pred_check_branch
      %95 = sbr.rel (0) target = $region41
    $region40: #{tpu_custom_call.1} parent=1 // pred_region
      _
    $region41: #{tpu_custom_call.1} parent=1 // pred_fallthru
      _
    // Predicated region
    $region42: #{tpu_custom_call.1} parent=1 // pred_check
      _
    $region43: #{tpu_custom_call.1} parent=1 // pred_check_branch
      %97 = sbr.rel (0) target = $region45
    $region44: #{tpu_custom_call.1} parent=1 // pred_region
      %98 = dma.done [#allocation3], 128
    $region45: #{tpu_custom_call.1} parent=1 // pred_fallthru
      _
    // Predicated region
    $region46: #{tpu_custom_call.1} parent=1 // pred_check
      _
    $region47: #{tpu_custom_call.1} parent=1 // pred_check_branch
      %100 = sbr.rel (0) target = $region49
    $region48: #{tpu_custom_call.1} parent=1 // pred_region
      %101 = dma.done [#allocation6], 128
    $region49: #{tpu_custom_call.1} parent=1 // pred_fallthru
      _
    // Predicated region
    $region50: #{tpu_custom_call.1} parent=1 // pred_check
      _
    $region51: #{tpu_custom_call.1} parent=1 // pred_check_branch
      %103 = sbr.rel (0) target = $region53
    $region52: #{tpu_custom_call.1} parent=1 // pred_region
      %104 = dma.done [#allocation6], 256
    $region53: #{tpu_custom_call.1} parent=1 // pred_fallthru
      _
    // Predicated region
    $region54: #{tpu_custom_call.1} parent=1 // pred_check
      _
    $region55: #{tpu_custom_call.1} parent=1 // pred_check_branch
      %106 = sbr.rel (0) target = $region57
    $region56: #{tpu_custom_call.1} parent=1 // pred_region
      %107 = dma.done [#allocation9], 256
    $region57: #{tpu_custom_call.1} parent=1 // pred_fallthru
      _
    // Predicated region
    $region58: #{tpu_custom_call.1} parent=1 // pred_check
      _
    $region59: #{tpu_custom_call.1} parent=1 // pred_check_branch
      %109 = sbr.rel (0) target = $region61
    $region60: #{tpu_custom_call.1} parent=1 // pred_region
      %110 = dma.done [#allocation9], 2048
    $region61: #{tpu_custom_call.1} parent=1 // pred_fallthru
      _
    // Predicated region
    $region62: #{tpu_custom_call.1} parent=1 // pred_check
      _
    $region63: #{tpu_custom_call.1} parent=1 // pred_check_branch
      %112 = sbr.rel (0) target = $region65
    $region64: #{tpu_custom_call.1} parent=1 // pred_region
      %113 = dma.done [#allocation12], 256
    $region65: #{tpu_custom_call.1} parent=1 // pred_fallthru
      _
    %v114 = vld [vmem:[#allocation2] sm:$0xff]
    %v115 = vld [vmem:[#allocation5] sm:$0xff]
    %v116 = vld [vmem:[#allocation7] sm:$0xff]
    %v117 = vld [vmem:[#allocation7 + $0x8] sm:$0xff]
    %v118 = vld [vmem:[#allocation8] sm:$0xff]
    %v119 = vld [vmem:[#allocation8 + $0x8] sm:$0xff]
    %vm120 = vcmask 130048
    %v122 = vsel %vm120, %v115, 0
    %124 = vmatprep.subr.mxu0 0.0
    %125 = vmatpush1.msra.mxu0 %v118
    %126 = vmatprep.subr.mxu0 0.0
    %127 = vmatpush1.msra.mxu0 %v119
    %128 = vmatprep.subr.mxu0 0.0
    %129 = vmatpush1.msra.mxu0 0.0
    %130 = vmatprep.subr.mxu0 0.0
    %131 = vmatpush1.msra.mxu0 0.0
    %132 = vmatprep.subr.mxu0 0.0
    %133 = vmatpush1.msra.mxu0 0.0
    %134 = vmatprep.subr.mxu0 0.0
    %135 = vmatpush1.msra.mxu0 0.0
    %136 = vmatprep.subr.mxu0 0.0
    %137 = vmatpush1.msra.mxu0 0.0
    %138 = vmatprep.subr.mxu0 0.0
    %139 = vmatpush1.msra.mxu0 0.0
    %140 = vmatprep.subr.mxu0 0.0
    %141 = vmatpush1.msra.mxu0 0.0
    %142 = vmatprep.subr.mxu0 0.0
    %143 = vmatpush1.msra.mxu0 0.0
    %144 = vmatprep.subr.mxu0 0.0
    %145 = vmatpush1.msra.mxu0 0.0
    %146 = vmatprep.subr.mxu0 0.0
    %147 = vmatpush1.msra.mxu0 0.0
    %148 = vmatprep.subr.mxu0 0.0
    %149 = vmatpush1.msra.mxu0 0.0
    %150 = vmatprep.subr.mxu0 0.0
    %151 = vmatpush1.msra.mxu0 0.0
    %152 = vmatprep.subr.mxu0 0.0
    %153 = vmatpush1.msra.mxu0 0.0
    %154 = vmatprep.subr.mxu0 0.0
    %155 = vmatpush1.msra.mxu0 0.0
    %156 = vmatprep.subr.mxu0 0.0
    %157 = vmatpush1.msra.mxu0 0.0
    %158 = vmatprep.subr.mxu0 0.0
    %159 = vmatpush1.msra.mxu0 0.0
    %160 = vmatprep.subr.mxu0 0.0
    %161 = vmatpush1.msra.mxu0 0.0
    %162 = vmatprep.subr.mxu0 0.0
    %163 = vmatpush1.msra.mxu0 0.0
    %164 = vmatprep.subr.mxu0 0.0
    %165 = vmatpush1.msra.mxu0 0.0
    %166 = vmatprep.subr.mxu0 0.0
    %167 = vmatpush1.msra.mxu0 0.0
    %168 = vmatprep.subr.mxu0 0.0
    %169 = vmatpush1.msra.mxu0 0.0
    %170 = vmatprep.subr.mxu0 0.0
    %171 = vmatpush1.msra.mxu0 0.0
    %172 = vmatprep.subr.mxu0 0.0
    %173 = vmatpush1.msra.mxu0 0.0
    %174 = vmatprep.subr.mxu0 0.0
    %175 = vmatpush1.msra.mxu0 0.0
    %176 = vmatprep.subr.mxu0 0.0
    %177 = vmatpush1.msra.mxu0 0.0
    %178 = vmatprep.subr.mxu0 0.0
    %179 = vmatpush1.msra.mxu0 0.0
    %180 = vmatprep.subr.mxu0 0.0
    %181 = vmatpush1.msra.mxu0 0.0
    %182 = vmatprep.subr.mxu0 0.0
    %183 = vmatpush1.msra.mxu0 0.0
    %184 = vmatprep.subr.mxu0 0.0
    %185 = vmatpush1.msra.mxu0 0.0
    %186 = vmatprep.subr.mxu0 0.0
    %187 = vmatpush1.msra.mxu0 0.0
    %188 = vmatprep.mubr.f32.mxu0 0.0
    %189 = vmatmul.mubr.f32.gmra.mrb[0].mxu0 %v122
    %v190 = vpop.f32.mrb[0].mxu0
    %v191 = vadd.f32 0.0, %v190
    %v192 = vpop.f32.mrb[0].mxu0
    %193 = vdwg.mxu0
    %v195 = vsel %vm120, %v114, 0
    %197 = vmatprep.subr.mxu0 0.0
    %198 = vmatpush1.msra.mxu0 %v116
    %199 = vmatprep.subr.mxu0 0.0
    %200 = vmatpush1.msra.mxu0 %v117
    %201 = vmatprep.subr.mxu0 0.0
    %202 = vmatpush1.msra.mxu0 0.0
    %203 = vmatprep.subr.mxu0 0.0
    %204 = vmatpush1.msra.mxu0 0.0
    %205 = vmatprep.subr.mxu0 0.0
    %206 = vmatpush1.msra.mxu0 0.0
    %207 = vmatprep.subr.mxu0 0.0
    %208 = vmatpush1.msra.mxu0 0.0
    %209 = vmatprep.subr.mxu0 0.0
    %210 = vmatpush1.msra.mxu0 0.0
    %211 = vmatprep.subr.mxu0 0.0
    %212 = vmatpush1.msra.mxu0 0.0
    %213 = vmatprep.subr.mxu0 0.0
    %214 = vmatpush1.msra.mxu0 0.0
    %215 = vmatprep.subr.mxu0 0.0
    %216 = vmatpush1.msra.mxu0 0.0
    %217 = vmatprep.subr.mxu0 0.0
    %218 = vmatpush1.msra.mxu0 0.0
    %219 = vmatprep.subr.mxu0 0.0
    %220 = vmatpush1.msra.mxu0 0.0
    %221 = vmatprep.subr.mxu0 0.0
    %222 = vmatpush1.msra.mxu0 0.0
    %223 = vmatprep.subr.mxu0 0.0
    %224 = vmatpush1.msra.mxu0 0.0
    %225 = vmatprep.subr.mxu0 0.0
    %226 = vmatpush1.msra.mxu0 0.0
    %227 = vmatprep.subr.mxu0 0.0
    %228 = vmatpush1.msra.mxu0 0.0
    %229 = vmatprep.subr.mxu0 0.0
    %230 = vmatpush1.msra.mxu0 0.0
    %231 = vmatprep.subr.mxu0 0.0
    %232 = vmatpush1.msra.mxu0 0.0
    %233 = vmatprep.subr.mxu0 0.0
    %234 = vmatpush1.msra.mxu0 0.0
    %235 = vmatprep.subr.mxu0 0.0
    %236 = vmatpush1.msra.mxu0 0.0
    %237 = vmatprep.subr.mxu0 0.0
    %238 = vmatpush1.msra.mxu0 0.0
    %239 = vmatprep.subr.mxu0 0.0
    %240 = vmatpush1.msra.mxu0 0.0
    %241 = vmatprep.subr.mxu0 0.0
    %242 = vmatpush1.msra.mxu0 0.0
    %243 = vmatprep.subr.mxu0 0.0
    %244 = vmatpush1.msra.mxu0 0.0
    %245 = vmatprep.subr.mxu0 0.0
    %246 = vmatpush1.msra.mxu0 0.0
    %247 = vmatprep.subr.mxu0 0.0
    %248 = vmatpush1.msra.mxu0 0.0
    %249 = vmatprep.subr.mxu0 0.0
    %250 = vmatpush1.msra.mxu0 0.0
    %251 = vmatprep.subr.mxu0 0.0
    %252 = vmatpush1.msra.mxu0 0.0
    %253 = vmatprep.subr.mxu0 0.0
    %254 = vmatpush1.msra.mxu0 0.0
    %255 = vmatprep.subr.mxu0 0.0
    %256 = vmatpush1.msra.mxu0 0.0
    %257 = vmatprep.subr.mxu0 0.0
    %258 = vmatpush1.msra.mxu0 0.0
    %259 = vmatprep.subr.mxu0 0.0
    %260 = vmatpush1.msra.mxu0 0.0
    %261 = vmatprep.mubr.f32.mxu0 0.0
    %262 = vmatmul.mubr.f32.gmra.mrb[0].mxu0 %v195
    %v263 = vpop.f32.mrb[0].mxu0
    %v264 = vadd.f32 %v191, %v263
    %v265 = vpop.f32.mrb[0].mxu0
    %266 = vdwg.mxu0
    %v267 = vld [vmem:[%s4] sm:$0x1]
    %v269 = vlaneseq
    %v270 = vshrl.u32 %v269, 7
    %v271 = vsub.s32 0, %v270
    %v272 = vrot.slane %v267, %v271
    %v274 = vadd.f32 %v264, %v272
    %v275 = vmax.f32 %v274, 0.0
    %v276 = vld [vmem:[#allocation10] sm:$0xff]
    %v277 = vld [vmem:[#allocation10 + $0x8] sm:$0xff]
    %v278 = vld [vmem:[#allocation10 + $0x10] sm:$0xff]
    %v279 = vld [vmem:[#allocation10 + $0x18] sm:$0xff]
    %v280 = vld [vmem:[#allocation10 + $0x20] sm:$0xff]
    %v281 = vld [vmem:[#allocation10 + $0x28] sm:$0xff]
    %v282 = vld [vmem:[#allocation10 + $0x30] sm:$0xff]
    %v283 = vld [vmem:[#allocation10 + $0x38] sm:$0xff]
    %v284 = vld [vmem:[#allocation10 + $0x40] sm:$0xff]
    %v285 = vld [vmem:[#allocation10 + $0x48] sm:$0xff]
    %v286 = vld [vmem:[#allocation10 + $0x50] sm:$0xff]
    %v287 = vld [vmem:[#allocation10 + $0x58] sm:$0xff]
    %v288 = vld [vmem:[#allocation10 + $0x60] sm:$0xff]
    %v289 = vld [vmem:[#allocation10 + $0x68] sm:$0xff]
    %v290 = vld [vmem:[#allocation10 + $0x70] sm:$0xff]
    %v291 = vld [vmem:[#allocation10 + $0x78] sm:$0xff]
    %v292 = vld [vmem:[%s6] sm:$0x1]
    %v294 = vlaneseq
    %v295 = vshrl.u32 %v294, 7
    %v296 = vsub.s32 0, %v295
    %v297 = vrot.slane %v292, %v296
    %299 = vmatprep.subr.mxu0 0.0
    %300 = vmatpush1.msra.mxu0 %v276
    %301 = vmatprep.subr.mxu0 0.0
    %302 = vmatpush1.msra.mxu0 %v277
    %303 = vmatprep.subr.mxu0 0.0
    %304 = vmatpush1.msra.mxu0 %v278
    %305 = vmatprep.subr.mxu0 0.0
    %306 = vmatpush1.msra.mxu0 %v279
    %307 = vmatprep.subr.mxu0 0.0
    %308 = vmatpush1.msra.mxu0 %v280
    %309 = vmatprep.subr.mxu0 0.0
    %310 = vmatpush1.msra.mxu0 %v281
    %311 = vmatprep.subr.mxu0 0.0
    %312 = vmatpush1.msra.mxu0 %v282
    %313 = vmatprep.subr.mxu0 0.0
    %314 = vmatpush1.msra.mxu0 %v283
    %315 = vmatprep.subr.mxu0 0.0
    %316 = vmatpush1.msra.mxu0 %v284
    %317 = vmatprep.subr.mxu0 0.0
    %318 = vmatpush1.msra.mxu0 %v285
    %319 = vmatprep.subr.mxu0 0.0
    %320 = vmatpush1.msra.mxu0 %v286
    %321 = vmatprep.subr.mxu0 0.0
    %322 = vmatpush1.msra.mxu0 %v287
    %323 = vmatprep.subr.mxu0 0.0
    %324 = vmatpush1.msra.mxu0 %v288
    %325 = vmatprep.subr.mxu0 0.0
    %326 = vmatpush1.msra.mxu0 %v289
    %327 = vmatprep.subr.mxu0 0.0
    %328 = vmatpush1.msra.mxu0 %v290
    %329 = vmatprep.subr.mxu0 0.0
    %330 = vmatpush1.msra.mxu0 %v291
    %331 = vmatprep.subr.mxu0 0.0
    %332 = vmatpush1.msra.mxu0 0.0
    %333 = vmatprep.subr.mxu0 0.0
    %334 = vmatpush1.msra.mxu0 0.0
    %335 = vmatprep.subr.mxu0 0.0
    %336 = vmatpush1.msra.mxu0 0.0
    %337 = vmatprep.subr.mxu0 0.0
    %338 = vmatpush1.msra.mxu0 0.0
    %339 = vmatprep.subr.mxu0 0.0
    %340 = vmatpush1.msra.mxu0 0.0
    %341 = vmatprep.subr.mxu0 0.0
    %342 = vmatpush1.msra.mxu0 0.0
    %343 = vmatprep.subr.mxu0 0.0
    %344 = vmatpush1.msra.mxu0 0.0
    %345 = vmatprep.subr.mxu0 0.0
    %346 = vmatpush1.msra.mxu0 0.0
    %347 = vmatprep.subr.mxu0 0.0
    %348 = vmatpush1.msra.mxu0 0.0
    %349 = vmatprep.subr.mxu0 0.0
    %350 = vmatpush1.msra.mxu0 0.0
    %351 = vmatprep.subr.mxu0 0.0
    %352 = vmatpush1.msra.mxu0 0.0
    %353 = vmatprep.subr.mxu0 0.0
    %354 = vmatpush1.msra.mxu0 0.0
    %355 = vmatprep.subr.mxu0 0.0
    %356 = vmatpush1.msra.mxu0 0.0
    %357 = vmatprep.subr.mxu0 0.0
    %358 = vmatpush1.msra.mxu0 0.0
    %359 = vmatprep.subr.mxu0 0.0
    %360 = vmatpush1.msra.mxu0 0.0
    %361 = vmatprep.subr.mxu0 0.0
    %362 = vmatpush1.msra.mxu0 0.0
    %363 = vmatprep.mubr.f32.mxu0 0.0
    %364 = vmatmul.mubr.f32.gmra.mrb[0].mxu0 %v275
    %v365 = vpop.f32.mrb[0].mxu0
    %v366 = vadd.f32 %v297, %v365
    %v367 = vpop.f32.mrb[0].mxu0
    %368 = vdwg.mxu0
    %v369 = vxor.u32 %v366, 2147483648
    %v370 = vmul.f32 %v369, 1.442695
    %v371 = vpow.pop %v370
    %v372 = vadd.f32 %v371, 1.0
    %v373 = vrcp.pop %v372
    %v374 = vmul.f32 1.0, %v373
    %v375 = vld [vmem:[%s7] sm:$0xff]
    %v376 = vld [vmem:[%s7 + $0x8] sm:$0xff]
    %v377 = vld [vmem:[#allocation11] sm:$0xff]
    %v378 = vld [vmem:[#allocation11 + $0x8] sm:$0xff]
    %379 = vmatprep.subr.mxu0 0.0
    %380 = vmatpush1.msra.mxu0 %v377
    %381 = vmatprep.subr.mxu0 0.0
    %382 = vmatpush1.msra.mxu0 %v378
    %383 = vmatprep.subr.mxu0 0.0
    %384 = vmatpush1.msra.mxu0 0.0
    %385 = vmatprep.subr.mxu0 0.0
    %386 = vmatpush1.msra.mxu0 0.0
    %387 = vmatprep.subr.mxu0 0.0
    %388 = vmatpush1.msra.mxu0 0.0
    %389 = vmatprep.subr.mxu0 0.0
    %390 = vmatpush1.msra.mxu0 0.0
    %391 = vmatprep.subr.mxu0 0.0
    %392 = vmatpush1.msra.mxu0 0.0
    %393 = vmatprep.subr.mxu0 0.0
    %394 = vmatpush1.msra.mxu0 0.0
    %395 = vmatprep.subr.mxu0 0.0
    %396 = vmatpush1.msra.mxu0 0.0
    %397 = vmatprep.subr.mxu0 0.0
    %398 = vmatpush1.msra.mxu0 0.0
    %399 = vmatprep.subr.mxu0 0.0
    %400 = vmatpush1.msra.mxu0 0.0
    %401 = vmatprep.subr.mxu0 0.0
    %402 = vmatpush1.msra.mxu0 0.0
    %403 = vmatprep.subr.mxu0 0.0
    %404 = vmatpush1.msra.mxu0 0.0
    %405 = vmatprep.subr.mxu0 0.0
    %406 = vmatpush1.msra.mxu0 0.0
    %407 = vmatprep.subr.mxu0 0.0
    %408 = vmatpush1.msra.mxu0 0.0
    %409 = vmatprep.subr.mxu0 0.0
    %410 = vmatpush1.msra.mxu0 0.0
    %411 = vmatprep.subr.mxu0 0.0
    %412 = vmatpush1.msra.mxu0 0.0
    %413 = vmatprep.subr.mxu0 0.0
    %414 = vmatpush1.msra.mxu0 0.0
    %415 = vmatprep.subr.mxu0 0.0
    %416 = vmatpush1.msra.mxu0 0.0
    %417 = vmatprep.subr.mxu0 0.0
    %418 = vmatpush1.msra.mxu0 0.0
    %419 = vmatprep.subr.mxu0 0.0
    %420 = vmatpush1.msra.mxu0 0.0
    %421 = vmatprep.subr.mxu0 0.0
    %422 = vmatpush1.msra.mxu0 0.0
    %423 = vmatprep.subr.mxu0 0.0
    %424 = vmatpush1.msra.mxu0 0.0
    %425 = vmatprep.subr.mxu0 0.0
    %426 = vmatpush1.msra.mxu0 0.0
    %427 = vmatprep.subr.mxu0 0.0
    %428 = vmatpush1.msra.mxu0 0.0
    %429 = vmatprep.subr.mxu0 0.0
    %430 = vmatpush1.msra.mxu0 0.0
    %431 = vmatprep.subr.mxu0 0.0
    %432 = vmatpush1.msra.mxu0 0.0
    %433 = vmatprep.subr.mxu0 0.0
    %434 = vmatpush1.msra.mxu0 0.0
    %435 = vmatprep.subr.mxu0 0.0
    %436 = vmatpush1.msra.mxu0 0.0
    %437 = vmatprep.subr.mxu0 0.0
    %438 = vmatpush1.msra.mxu0 0.0
    %439 = vmatprep.subr.mxu0 0.0
    %440 = vmatpush1.msra.mxu0 0.0
    %441 = vmatprep.subr.mxu0 0.0
    %442 = vmatpush1.msra.mxu0 0.0
    %443 = vmatprep.mubr.f32.mxu0 0.0
    %444 = vmatmul.mubr.f32.gmra.mrb[0].mxu0 %v122
    %v445 = vpop.f32.mrb[0].mxu0
    %v446 = vadd.f32 0.0, %v445
    %v447 = vpop.f32.mrb[0].mxu0
    %448 = vdwg.mxu0
    %449 = vmatprep.subr.mxu0 0.0
    %450 = vmatpush1.msra.mxu0 %v375
    %451 = vmatprep.subr.mxu0 0.0
    %452 = vmatpush1.msra.mxu0 %v376
    %453 = vmatprep.subr.mxu0 0.0
    %454 = vmatpush1.msra.mxu0 0.0
    %455 = vmatprep.subr.mxu0 0.0
    %456 = vmatpush1.msra.mxu0 0.0
    %457 = vmatprep.subr.mxu0 0.0
    %458 = vmatpush1.msra.mxu0 0.0
    %459 = vmatprep.subr.mxu0 0.0
    %460 = vmatpush1.msra.mxu0 0.0
    %461 = vmatprep.subr.mxu0 0.0
    %462 = vmatpush1.msra.mxu0 0.0
    %463 = vmatprep.subr.mxu0 0.0
    %464 = vmatpush1.msra.mxu0 0.0
    %465 = vmatprep.subr.mxu0 0.0
    %466 = vmatpush1.msra.mxu0 0.0
    %467 = vmatprep.subr.mxu0 0.0
    %468 = vmatpush1.msra.mxu0 0.0
    %469 = vmatprep.subr.mxu0 0.0
    %470 = vmatpush1.msra.mxu0 0.0
    %471 = vmatprep.subr.mxu0 0.0
    %472 = vmatpush1.msra.mxu0 0.0
    %473 = vmatprep.subr.mxu0 0.0
    %474 = vmatpush1.msra.mxu0 0.0
    %475 = vmatprep.subr.mxu0 0.0
    %476 = vmatpush1.msra.mxu0 0.0
    %477 = vmatprep.subr.mxu0 0.0
    %478 = vmatpush1.msra.mxu0 0.0
    %479 = vmatprep.subr.mxu0 0.0
    %480 = vmatpush1.msra.mxu0 0.0
    %481 = vmatprep.subr.mxu0 0.0
    %482 = vmatpush1.msra.mxu0 0.0
    %483 = vmatprep.subr.mxu0 0.0
    %484 = vmatpush1.msra.mxu0 0.0
    %485 = vmatprep.subr.mxu0 0.0
    %486 = vmatpush1.msra.mxu0 0.0
    %487 = vmatprep.subr.mxu0 0.0
    %488 = vmatpush1.msra.mxu0 0.0
    %489 = vmatprep.subr.mxu0 0.0
    %490 = vmatpush1.msra.mxu0 0.0
    %491 = vmatprep.subr.mxu0 0.0
    %492 = vmatpush1.msra.mxu0 0.0
    %493 = vmatprep.subr.mxu0 0.0
    %494 = vmatpush1.msra.mxu0 0.0
    %495 = vmatprep.subr.mxu0 0.0
    %496 = vmatpush1.msra.mxu0 0.0
    %497 = vmatprep.subr.mxu0 0.0
    %498 = vmatpush1.msra.mxu0 0.0
    %499 = vmatprep.subr.mxu0 0.0
    %500 = vmatpush1.msra.mxu0 0.0
    %501 = vmatprep.subr.mxu0 0.0
    %502 = vmatpush1.msra.mxu0 0.0
    %503 = vmatprep.subr.mxu0 0.0
    %504 = vmatpush1.msra.mxu0 0.0
    %505 = vmatprep.subr.mxu0 0.0
    %506 = vmatpush1.msra.mxu0 0.0
    %507 = vmatprep.subr.mxu0 0.0
    %508 = vmatpush1.msra.mxu0 0.0
    %509 = vmatprep.subr.mxu0 0.0
    %510 = vmatpush1.msra.mxu0 0.0
    %511 = vmatprep.subr.mxu0 0.0
    %512 = vmatpush1.msra.mxu0 0.0
    %513 = vmatprep.mubr.f32.mxu0 0.0
    %514 = vmatmul.mubr.f32.gmra.mrb[0].mxu0 %v195
    %v515 = vpop.f32.mrb[0].mxu0
    %v516 = vadd.f32 %v446, %v515
    %v517 = vpop.f32.mrb[0].mxu0
    %518 = vdwg.mxu0
    %v519 = vld [vmem:[%s9] sm:$0x1]
    %v521 = vlaneseq
    %v522 = vshrl.u32 %v521, 7
    %v523 = vsub.s32 0, %v522
    %v524 = vrot.slane %v519, %v523
    %v526 = vadd.f32 %v516, %v524
    %v527 = vmul.f32 %v374, %v526
    %vm528 = vcmask 261120
    %529 = vst.msk [vmem:[#allocation13] sm:$0xff] %vm528, %v527
    // Predicated region
    $region66: #{tpu_custom_call.1} parent=1 // pred_check
      _
    $region67: #{tpu_custom_call.1} parent=1 // pred_check_branch
      %531 = sbr.rel (0) target = $region69
    $region68: #{tpu_custom_call.1} parent=1 // pred_region
      %s533 = ssub.s32 128, 128
      %534 = vsyncadd [#allocation4], %s533
      %s536 = sshll.u32 [#allocation13], 4
      %s537 = int_to_ptr.vmem [resolvable:$true] %s536
      %539 = dma.vmem_to_hbm [thread:$0]  %s537, 128, %s10, [#allocation4]
    $region69: #{tpu_custom_call.1} parent=1 // pred_fallthru
      _
    // Predicated region
    $region70: #{tpu_custom_call.1} parent=1 // pred_check
      _
    $region71: #{tpu_custom_call.1} parent=1 // pred_check_branch
      %541 = sbr.rel (0) target = $region73
    $region72: #{tpu_custom_call.1} parent=1 // pred_region
      %542 = dma.done [#allocation4], 128
    $region73: #{tpu_custom_call.1} parent=1 // pred_fallthru
      _
    %543 = vsyncpa [#allocation3], 1
    %544 = vsyncpa [#allocation6], 1
    %545 = vsyncpa [#allocation9], 1
    %546 = vsyncpa [#allocation12], 1
    %547 = vsyncpa [#allocation4], 1

</llo_original>
